<compile_context>
chip_gen: v7x
topology: tpu7x:2x2x1
jax: 0.10.0
libtpu: 0.0.40
codegen_flags: <defaults>
</compile_context>

<pallas_src>
import jax
import jax.numpy as jnp
import numpy as np
from jax.experimental import pallas as pl
from jax.experimental.pallas import tpu as pltpu


# ----------------------------------------------------------------------------- kernel
def _edge_gated_kernel(nf_ref, ef_ref, goh_ref, doh_ref,
                       w4_ref, b4_ref, weg_ref, beg_ref,
                       bnn_ref, bne_ref,
                       x_out_ref, y_out_ref,
                       node4_sc, grhs_sc, acc_sc):
    i = pl.program_id(0)
    N, O = x_out_ref.shape
    f32, bf16 = jnp.float32, jnp.bfloat16
    dot = lambda a, b: jnp.dot(a, b, preferred_element_type=f32)

    # ---- first edge tile: fused node linear, gather RHS, accumulator init ------------
    @pl.when(i == 0)
    def _():
        # fused weight columns are ordered [src_gate | dst_update | dst_gate | src_update]
        node4 = dot(nf_ref[...], w4_ref[...]) + b4_ref[...]          # [N, 4O] f32
        node4_sc[...] = node4
        top = node4[:, : 2 * O]                                      # [e_src | Bh]
        bot = jnp.concatenate([node4[:, 2 * O: 3 * O],
                               jnp.zeros((N, O), f32)], axis=1)      # [e_dst | 0]
        grhs_sc[...] = jnp.concatenate([top, bot], axis=0).astype(bf16)   # [2N, 2O]
        acc_sc[...] = jnp.zeros_like(acc_sc)

    # ---- per-edge-tile compute --------------------------------------------------------
    ef = ef_ref[...]                                                 # [TE, F] f32
    e_gate = dot(ef.astype(bf16), weg_ref[...]) + beg_ref[...]       # [TE, O]  edge_gate(e)

    # fused gather: [src_oh | dst_oh] @ [[e_src|Bh],[e_dst|0]]
    gath = dot(goh_ref[...], grhs_sc[...])                           # [TE, 2O] f32
    m = gath[:, :O] + e_gate                                         # e_src[u]+e_dst[v]+Eg(e)
    sigma = jax.nn.sigmoid(m)
    msg = gath[:, O:] * sigma                                        # Bh[u] * sigma

    # fused scatter-add over destination nodes: acc += dst_oh^T @ [msg | sigma]
    scat = jnp.concatenate([msg, sigma], axis=1).astype(bf16)        # [TE, 2O]
    acc_sc[...] += jax.lax.dot_general(
        doh_ref[...], scat,
        dimension_numbers=(((0,), (0,)), ((), ())),
        preferred_element_type=f32)                                  # [N, 2O]

    # edge output: BatchNorm(eval) + SiLU + residual (Dropout identity in eval mode)
    y_bn = m * bne_ref[0:1, :] + bne_ref[1:2, :]
    y_out_ref[...] = (ef + y_bn * jax.nn.sigmoid(y_bn)).astype(y_out_ref.dtype)

    # ---- last edge tile: node aggregation + node output --------------------------------
    @pl.when(i == pl.num_programs(0) - 1)
    def _():
        acc = acc_sc[...]
        h = acc[:, :O] * pl.reciprocal(acc[:, O:] + 1e-6, approx=True)
        x = node4_sc[:, 3 * O:] + h                                  # src_update(h) + h_agg
        x_bn = x * bnn_ref[0:1, :] + bnn_ref[1:2, :]
        x_out_ref[...] = (nf_ref[...] + x_bn * jax.nn.sigmoid(x_bn)).astype(x_out_ref.dtype)


# ---------------------------------------------------------------------------- wrapper
def edge_gated_graph_conv(src, dst, node_feats, edge_feats, params, *, edge_tile=256):
    """src/dst: int32 [E] edge endpoints (edge j->i has src=j, dst=i)."""
    N, F = node_feats.shape
    E = edge_feats.shape[0]
    O = params["w_sg"].shape[1]

    # edge tile: multiple of 16 (bf16 sublane packing); pad E so the grid divides evenly
    TE = max(16, (min(edge_tile, E) // 16) * 16)
    n_tiles = -(-E // TE)
    E_pad = n_tiles * TE
    if E_pad != E:
        pad = E_pad - E
        edge_feats_p = jnp.concatenate(
            [edge_feats, jnp.zeros((pad, F), edge_feats.dtype)], axis=0)
        # out-of-range index -> all-zero one-hot row -> padded edges never touch the scatter
        src_p = jnp.concatenate([src, jnp.full((pad,), N, src.dtype)])
        dst_p = jnp.concatenate([dst, jnp.full((pad,), N, dst.dtype)])
    else:
        edge_feats_p, src_p, dst_p = edge_feats, src, dst

    # one-hot gather/scatter operands in bf16 (0/1 exact; half the HBM bytes, bf16 MXU)
    src_oh = jax.nn.one_hot(src_p, N, dtype=jnp.bfloat16)            # [E_pad, N]
    dst_oh = jax.nn.one_hot(dst_p, N, dtype=jnp.bfloat16)            # [E_pad, N]
    gather_oh = jnp.concatenate([src_oh, dst_oh], axis=1)            # [E_pad, 2N]

    # fuse the four node-side linears into one [F, 4O] weight (lane-dense result);
    # column order [src_gate | dst_update | dst_gate | src_update]
    w4 = jnp.concatenate([params["w_sg"], params["w_du"],
                          params["w_dg"], params["w_su"]], axis=1)
    b4 = jnp.concatenate([params["b_sg"], params["b_du"],
                          params["b_dg"], params["b_su"]], axis=1)

    # fold BatchNorm (inference) into scale/shift: [gamma,beta,mean,var] -> [scale,shift]
    def fold_bn(bn):
        scale = bn[0] * jax.lax.rsqrt(bn[3] + 1e-5)
        return jnp.stack([scale, bn[1] - bn[2] * scale])
    bn_n = fold_bn(params["bn_n"])
    bn_e = fold_bn(params["bn_e"])

    w_eg = params["w_eg"].astype(jnp.bfloat16)
    b_eg = params["b_eg"]

    const2d = lambda shape: pl.BlockSpec(shape, lambda i: (0, 0))
    edge_spec = lambda cols: pl.BlockSpec((TE, cols), lambda i: (i, 0))

    x_out, y_out = pl.pallas_call(
        _edge_gated_kernel,
        grid_spec=pltpu.PrefetchScalarGridSpec(
            num_scalar_prefetch=0,
            grid=(n_tiles,),
            in_specs=[
                const2d((N, F)),             # node feats (resident across the grid)
                edge_spec(F),                # edge feats tile
                edge_spec(2 * N),            # [src|dst] one-hot tile (gather)
                edge_spec(N),                # dst one-hot tile (scatter)
                const2d((F, 4 * O)),         # fused node weights
                const2d((1, 4 * O)),         # fused node biases
                const2d((F, O)),             # edge_gate weight (bf16)
                const2d((1, O)),             # edge_gate bias
                const2d((2, O)),             # node BN scale/shift
                const2d((2, O)),             # edge BN scale/shift
            ],
            out_specs=[
                const2d((N, O)),             # node output (finalized on last tile)
                edge_spec(O),                # edge output tile
            ],
            scratch_shapes=[
                pltpu.VMEM((N, 4 * O), jnp.float32),       # fused node linear result
                pltpu.VMEM((2 * N, 2 * O), jnp.bfloat16),  # gather RHS [[e_src|Bh],[e_dst|0]]
                pltpu.VMEM((N, 2 * O), jnp.float32),       # [sum_sigma_h | sum_sigma]
            ],
        ),
        out_shape=(
            jax.ShapeDtypeStruct((N, O), node_feats.dtype),
            jax.ShapeDtypeStruct((E_pad, O), edge_feats.dtype),
        ),
        # The single grid axis carries the node-side scatter reduction -> "arbitrary".
        # TODO(synk): split an edge-parallel grid axis (or per-core node partition) to use
        #             both v7x TensorCores; raise vmem_limit_bytes when tiles grow large.
        compiler_params=pltpu.CompilerParams(dimension_semantics=("arbitrary",)),
    )(node_feats, edge_feats_p, gather_oh, dst_oh, w4, b4, w_eg, b_eg, bn_n, bn_e)

    if E_pad != E:
        y_out = y_out[:E]
    return x_out, y_out


# ------------------------------------------------------------------- pure-JAX reference
def reference(src, dst, node_feats, edge_feats, p):
    lin = lambda v, w, b: v @ w + b
    e_src = lin(node_feats, p["w_sg"], p["b_sg"])
    e_dst = lin(node_feats, p["w_dg"], p["b_dg"])
    m = e_src[src] + e_dst[dst] + lin(edge_feats, p["w_eg"], p["b_eg"])
    sigma = jax.nn.sigmoid(m)
    Bh = lin(node_feats, p["w_du"], p["b_du"])
    msg = Bh[src] * sigma
    N = node_feats.shape[0]
    sum_sigma_h = jax.ops.segment_sum(msg, dst, N)
    sum_sigma = jax.ops.segment_sum(sigma, dst, N)
    h = sum_sigma_h / (sum_sigma + 1e-6)
    x = lin(node_feats, p["w_su"], p["b_su"]) + h
    bn = lambda v, q: (v - q[2]) * jax.lax.rsqrt(q[3] + 1e-5) * q[0] + q[1]
    silu = lambda v: v * jax.nn.sigmoid(v)
    return node_feats + silu(bn(x, p["bn_n"])), edge_feats + silu(bn(m, p["bn_e"]))


# ---------------------------------------------------------------------------- params
def init_params(key, f_in, f_out):
    ks = jax.random.split(key, 10)
    k = 1.0 / np.sqrt(f_in)

    def linear(kw, kb):
        w = jax.random.uniform(kw, (f_in, f_out), jnp.float32, -k, k)
        b = jax.random.uniform(kb, (1, f_out), jnp.float32, -k, k)
        return w, b

    p = {}
    for i, name in enumerate(["sg", "dg", "eg", "du", "su"]):
        w, b = linear(ks[2 * i], ks[2 * i + 1])
        p[f"w_{name}"] = w
        p[f"b_{name}"] = b
    # BatchNorm params stacked as [gamma, beta, running_mean, running_var] -> [4, O]
    o = jnp.arange(f_out, dtype=jnp.float32)
    p["bn_n"] = jnp.stack([1.0 + 0.01 * o, 0.02 * o - 0.1,
                           0.05 * jnp.sin(o), 1.0 + 0.1 * jnp.cos(o) ** 2])
    p["bn_e"] = jnp.stack([1.0 - 0.005 * o, 0.03 * jnp.cos(o),
                           0.04 * jnp.sin(o + 1.0), 1.2 + 0.05 * jnp.sin(o) ** 2])
    return p


# ------------------------------------------------------------------------------ main
if __name__ == "__main__":
    N, E, F = 16, 48, 32           # nodes, edges, features (residual => in == out)
    key = jax.random.PRNGKey(0)
    k_nf, k_ef, k_p = jax.random.split(key, 3)

    node_feats = jax.random.normal(k_nf, (N, F), jnp.float32)
    edge_feats = jax.random.normal(k_ef, (E, F), jnp.float32)
    # deterministic graph: each node is the destination of exactly 3 edges
    src = jnp.asarray(np.arange(E) % N, dtype=jnp.int32)
    dst = jnp.asarray((np.arange(E) * 3 + 1) % N, dtype=jnp.int32)

    params = init_params(k_p, F, F)

    # edge_tile=16 -> 3-step grid exercising the scatter accumulator / pipelining path
    x_out, y_out = edge_gated_graph_conv(src, dst, node_feats, edge_feats, params,
                                         edge_tile=16)
    jax.block_until_ready((x_out, y_out))

    x_ref, y_ref = reference(src, dst, node_feats, edge_feats, params)
    np.testing.assert_allclose(np.asarray(x_out), np.asarray(x_ref), rtol=2e-2, atol=2e-2)
    np.testing.assert_allclose(np.asarray(y_out), np.asarray(y_ref), rtol=2e-2, atol=2e-2)

    print("KERNEL_OK")
</pallas_src>

<mosaic_0001>
module attributes {stable_mosaic.version = 11 : i64} {
  func.func @_edge_gated_kernel(%arg0: i32, %arg1: memref<16x32xf32, #tpu.memory_space<vmem>>, %arg2: memref<16x32xf32, #tpu.memory_space<vmem>>, %arg3: memref<16x32xbf16, #tpu.memory_space<vmem>>, %arg4: memref<16x16xbf16, #tpu.memory_space<vmem>>, %arg5: memref<32x128xf32, #tpu.memory_space<vmem>>, %arg6: memref<1x128xf32, #tpu.memory_space<vmem>>, %arg7: memref<32x32xbf16, #tpu.memory_space<vmem>>, %arg8: memref<1x32xf32, #tpu.memory_space<vmem>>, %arg9: memref<2x32xf32, #tpu.memory_space<vmem>>, %arg10: memref<2x32xf32, #tpu.memory_space<vmem>>, %arg11: memref<16x32xf32, #tpu.memory_space<vmem>>, %arg12: memref<16x32xf32, #tpu.memory_space<vmem>>, %arg13: memref<16x128xf32, #tpu.memory_space<vmem>>, %arg14: memref<32x64xbf16, #tpu.memory_space<vmem>>, %arg15: memref<16x64xf32, #tpu.memory_space<vmem>>) attributes {dimension_semantics = [#tpu.dimension_semantics<arbitrary>], iteration_bounds = array<i64: 3>, scalar_prefetch = 0 : i64, scratch_operands = 3 : i64, tpu.core_type = #tpu.core_type<tc>, window_params = [{pipeline_mode = #tpu.pipeline_mode<synchronous>, transform_indices = @transform_0, window_bounds = array<i64: 16, 32>}, {transform_indices = @transform_1, window_bounds = array<i64: 16, 32>}, {transform_indices = @transform_2, window_bounds = array<i64: 16, 32>}, {transform_indices = @transform_3, window_bounds = array<i64: 16, 16>}, {pipeline_mode = #tpu.pipeline_mode<synchronous>, transform_indices = @transform_4, window_bounds = array<i64: 32, 128>}, {pipeline_mode = #tpu.pipeline_mode<synchronous>, transform_indices = @transform_5, window_bounds = array<i64: 1, 128>}, {pipeline_mode = #tpu.pipeline_mode<synchronous>, transform_indices = @transform_6, window_bounds = array<i64: 32, 32>}, {pipeline_mode = #tpu.pipeline_mode<synchronous>, transform_indices = @transform_7, window_bounds = array<i64: 1, 32>}, {pipeline_mode = #tpu.pipeline_mode<synchronous>, transform_indices = @transform_8, window_bounds = array<i64: 2, 32>}, {pipeline_mode = #tpu.pipeline_mode<synchronous>, transform_indices = @transform_9, window_bounds = array<i64: 2, 32>}, {pipeline_mode = #tpu.pipeline_mode<synchronous>, transform_indices = @transform_10, window_bounds = array<i64: 16, 32>}, {transform_indices = @transform_11, window_bounds = array<i64: 16, 32>}]} {
    %c0_i32 = arith.constant 0 : i32
    %0 = arith.cmpi eq, %arg0, %c0_i32 : i32
    %1 = arith.extui %0 : i1 to i32
    %c0_i32_0 = arith.constant 0 : i32
    %2 = arith.cmpi ne, %1, %c0_i32_0 : i32
    scf.if %2 {
      %c0_26 = arith.constant 0 : index
      %c0_27 = arith.constant 0 : index
      %46 = vector.load %arg1[%c0_26, %c0_27] : memref<16x32xf32, #tpu.memory_space<vmem>>, vector<16x32xf32>
      %c0_28 = arith.constant 0 : index
      %c0_29 = arith.constant 0 : index
      %47 = vector.load %arg5[%c0_28, %c0_29] : memref<32x128xf32, #tpu.memory_space<vmem>>, vector<32x128xf32>
      %cst_30 = arith.constant dense<0.000000e+00> : vector<16x128xf32>
      %48 = tpu.matmul %46, %47, %cst_30 {dimension_numbers = #tpu.dot_dimension_numbers<[1], [0], [0], [1], [0, 0, 1, 1], [], []>} : vector<16x32xf32>, vector<32x128xf32>, vector<16x128xf32> -> vector<16x128xf32>
      %c0_31 = arith.constant 0 : index
      %c0_32 = arith.constant 0 : index
      %49 = vector.load %arg6[%c0_31, %c0_32] : memref<1x128xf32, #tpu.memory_space<vmem>>, vector<1x128xf32>
      %50 = vector.broadcast %49 : vector<1x128xf32> to vector<16x128xf32>
      %51 = arith.addf %48, %50 : vector<16x128xf32>
      %c0_33 = arith.constant 0 : index
      %c0_34 = arith.constant 0 : index
      %52 = vector.load %arg13[%c0_33, %c0_34] : memref<16x128xf32, #tpu.memory_space<vmem>>, vector<16x128xf32>
      tpu.vector_store %arg13[%c0_33, %c0_34], %51 {strides = array<i32>} : memref<16x128xf32, #tpu.memory_space<vmem>>, vector<16x128xf32>,
      %53 = vector.extract_strided_slice %51 {offsets = [0, 0], sizes = [16, 64], strides = [1, 1]} : vector<16x128xf32> to vector<16x64xf32>
      %54 = vector.extract_strided_slice %51 {offsets = [0, 64], sizes = [16, 32], strides = [1, 1]} : vector<16x128xf32> to vector<16x32xf32>
      %cst_35 = arith.constant 0.000000e+00 : f32
      %55 = vector.broadcast %cst_35 : f32 to vector<16x32xf32>
      %56 = tpu.concatenate %54, %55 in 1 : vector<16x32xf32>, vector<16x32xf32> -> vector<16x64xf32>
      %57 = tpu.concatenate %53, %56 in 0 : vector<16x64xf32>, vector<16x64xf32> -> vector<32x64xf32>
      %58 = arith.truncf %57 : vector<32x64xf32> to vector<32x64xbf16>
      %c0_36 = arith.constant 0 : index
      %c0_37 = arith.constant 0 : index
      %59 = vector.load %arg14[%c0_36, %c0_37] : memref<32x64xbf16, #tpu.memory_space<vmem>>, vector<32x64xbf16>
      tpu.vector_store %arg14[%c0_36, %c0_37], %58 {strides = array<i32>} : memref<32x64xbf16, #tpu.memory_space<vmem>>, vector<32x64xbf16>,
      %cst_38 = arith.constant 0.000000e+00 : f32
      %60 = vector.broadcast %cst_38 : f32 to vector<16x64xf32>
      %c0_39 = arith.constant 0 : index
      %c0_40 = arith.constant 0 : index
      %61 = vector.load %arg15[%c0_39, %c0_40] : memref<16x64xf32, #tpu.memory_space<vmem>>, vector<16x64xf32>
      tpu.vector_store %arg15[%c0_39, %c0_40], %60 {strides = array<i32>} : memref<16x64xf32, #tpu.memory_space<vmem>>, vector<16x64xf32>,
    } else {
    }
    %c0 = arith.constant 0 : index
    %c0_1 = arith.constant 0 : index
    %3 = vector.load %arg2[%c0, %c0_1] : memref<16x32xf32, #tpu.memory_space<vmem>>, vector<16x32xf32>
    %4 = arith.truncf %3 : vector<16x32xf32> to vector<16x32xbf16>
    %c0_2 = arith.constant 0 : index
    %c0_3 = arith.constant 0 : index
    %5 = vector.load %arg7[%c0_2, %c0_3] : memref<32x32xbf16, #tpu.memory_space<vmem>>, vector<32x32xbf16>
    %cst = arith.constant dense<0.000000e+00> : vector<16x32xf32>
    %6 = tpu.matmul %4, %5, %cst {dimension_numbers = #tpu.dot_dimension_numbers<[1], [0], [0], [1], [0, 0, 1, 1], [], []>} : vector<16x32xbf16>, vector<32x32xbf16>, vector<16x32xf32> -> vector<16x32xf32>
    %c0_4 = arith.constant 0 : index
    %c0_5 = arith.constant 0 : index
    %7 = vector.load %arg8[%c0_4, %c0_5] : memref<1x32xf32, #tpu.memory_space<vmem>>, vector<1x32xf32>
    %8 = vector.broadcast %7 : vector<1x32xf32> to vector<16x32xf32>
    %9 = arith.addf %6, %8 : vector<16x32xf32>
    %c0_6 = arith.constant 0 : index
    %c0_7 = arith.constant 0 : index
    %10 = vector.load %arg3[%c0_6, %c0_7] : memref<16x32xbf16, #tpu.memory_space<vmem>>, vector<16x32xbf16>
    %c0_8 = arith.constant 0 : index
    %c0_9 = arith.constant 0 : index
    %11 = vector.load %arg14[%c0_8, %c0_9] : memref<32x64xbf16, #tpu.memory_space<vmem>>, vector<32x64xbf16>
    %cst_10 = arith.constant dense<0.000000e+00> : vector<16x64xf32>
    %12 = tpu.matmul %10, %11, %cst_10 {dimension_numbers = #tpu.dot_dimension_numbers<[1], [0], [0], [1], [0, 0, 1, 1], [], []>} : vector<16x32xbf16>, vector<32x64xbf16>, vector<16x64xf32> -> vector<16x64xf32>
    %13 = vector.extract_strided_slice %12 {offsets = [0, 0], sizes = [16, 32], strides = [1, 1]} : vector<16x64xf32> to vector<16x32xf32>
    %14 = arith.addf %13, %9 : vector<16x32xf32>
    %15 = arith.negf %14 : vector<16x32xf32>
    %16 = math.exp %15 : vector<16x32xf32>
    %cst_11 = arith.constant 1.000000e+00 : f32
    %17 = vector.broadcast %cst_11 : f32 to vector<16x32xf32>
    %18 = arith.addf %17, %16 : vector<16x32xf32>
    %19 = arith.divf %17, %18 : vector<16x32xf32>
    %20 = vector.extract_strided_slice %12 {offsets = [0, 32], sizes = [16, 32], strides = [1, 1]} : vector<16x64xf32> to vector<16x32xf32>
    %21 = arith.mulf %20, %19 : vector<16x32xf32>
    %22 = tpu.concatenate %21, %19 in 1 : vector<16x32xf32>, vector<16x32xf32> -> vector<16x64xf32>
    %23 = arith.truncf %22 : vector<16x64xf32> to vector<16x64xbf16>
    %c0_12 = arith.constant 0 : index
    %c0_13 = arith.constant 0 : index
    %24 = vector.load %arg15[%c0_12, %c0_13] : memref<16x64xf32, #tpu.memory_space<vmem>>, vector<16x64xf32>
    %c0_14 = arith.constant 0 : index
    %c0_15 = arith.constant 0 : index
    %25 = vector.load %arg4[%c0_14, %c0_15] : memref<16x16xbf16, #tpu.memory_space<vmem>>, vector<16x16xbf16>
    %cst_16 = arith.constant dense<0.000000e+00> : vector<16x64xf32>
    %26 = tpu.matmul %25, %23, %cst_16 {dimension_numbers = #tpu.dot_dimension_numbers<[0], [0], [1], [1], [0, 1, 1, 1], [], []>} : vector<16x16xbf16>, vector<16x64xbf16>, vector<16x64xf32> -> vector<16x64xf32>
    %27 = arith.addf %24, %26 : vector<16x64xf32>
    %c0_17 = arith.constant 0 : index
    %c0_18 = arith.constant 0 : index
    %28 = vector.load %arg15[%c0_17, %c0_18] : memref<16x64xf32, #tpu.memory_space<vmem>>, vector<16x64xf32>
    tpu.vector_store %arg15[%c0_17, %c0_18], %27 {strides = array<i32>} : memref<16x64xf32, #tpu.memory_space<vmem>>, vector<16x64xf32>,
    %c0_19 = arith.constant 0 : index
    %c0_20 = arith.constant 0 : index
    %29 = vector.load %arg10[%c0_19, %c0_20] : memref<2x32xf32, #tpu.memory_space<vmem>>, vector<1x32xf32>
    %30 = vector.broadcast %29 : vector<1x32xf32> to vector<16x32xf32>
    %31 = arith.mulf %14, %30 : vector<16x32xf32>
    %c1 = arith.constant 1 : index
    %c0_21 = arith.constant 0 : index
    %32 = vector.load %arg10[%c1, %c0_21] : memref<2x32xf32, #tpu.memory_space<vmem>>, vector<1x32xf32>
    %33 = vector.broadcast %32 : vector<1x32xf32> to vector<16x32xf32>
    %34 = arith.addf %31, %33 : vector<16x32xf32>
    %35 = arith.negf %34 : vector<16x32xf32>
    %36 = math.exp %35 : vector<16x32xf32>
    %cst_22 = arith.constant 1.000000e+00 : f32
    %37 = vector.broadcast %cst_22 : f32 to vector<16x32xf32>
    %38 = arith.addf %37, %36 : vector<16x32xf32>
    %39 = arith.divf %37, %38 : vector<16x32xf32>
    %40 = arith.mulf %34, %39 : vector<16x32xf32>
    %41 = arith.addf %3, %40 : vector<16x32xf32>
    %c0_23 = arith.constant 0 : index
    %c0_24 = arith.constant 0 : index
    %42 = vector.load %arg12[%c0_23, %c0_24] : memref<16x32xf32, #tpu.memory_space<vmem>>, vector<16x32xf32>
    tpu.vector_store %arg12[%c0_23, %c0_24], %41 {strides = array<i32>} : memref<16x32xf32, #tpu.memory_space<vmem>>, vector<16x32xf32>,
    %c2_i32 = arith.constant 2 : i32
    %43 = arith.cmpi eq, %arg0, %c2_i32 : i32
    %44 = arith.extui %43 : i1 to i32
    %c0_i32_25 = arith.constant 0 : i32
    %45 = arith.cmpi ne, %44, %c0_i32_25 : i32
    scf.if %45 {
      %c0_26 = arith.constant 0 : index
      %c0_27 = arith.constant 0 : index
      %46 = vector.load %arg15[%c0_26, %c0_27] : memref<16x64xf32, #tpu.memory_space<vmem>>, vector<16x64xf32>
      %47 = vector.extract_strided_slice %46 {offsets = [0, 0], sizes = [16, 32], strides = [1, 1]} : vector<16x64xf32> to vector<16x32xf32>
      %48 = vector.extract_strided_slice %46 {offsets = [0, 32], sizes = [16, 32], strides = [1, 1]} : vector<16x64xf32> to vector<16x32xf32>
      %cst_28 = arith.constant 9.99999997E-7 : f32
      %49 = vector.broadcast %cst_28 : f32 to vector<16x32xf32>
      %50 = arith.addf %48, %49 : vector<16x32xf32>
      %51 = tpu.reciprocal %50 {approx = true} : vector<16x32xf32> -> vector<16x32xf32>
      %52 = arith.mulf %47, %51 : vector<16x32xf32>
      %c0_29 = arith.constant 0 : index
      %c96 = arith.constant 96 : index
      %53 = vector.load %arg13[%c0_29, %c96] : memref<16x128xf32, #tpu.memory_space<vmem>>, vector<16x32xf32>
      %54 = arith.addf %53, %52 : vector<16x32xf32>
      %c0_30 = arith.constant 0 : index
      %c0_31 = arith.constant 0 : index
      %55 = vector.load %arg9[%c0_30, %c0_31] : memref<2x32xf32, #tpu.memory_space<vmem>>, vector<1x32xf32>
      %56 = vector.broadcast %55 : vector<1x32xf32> to vector<16x32xf32>
      %57 = arith.mulf %54, %56 : vector<16x32xf32>
      %c1_32 = arith.constant 1 : index
      %c0_33 = arith.constant 0 : index
      %58 = vector.load %arg9[%c1_32, %c0_33] : memref<2x32xf32, #tpu.memory_space<vmem>>, vector<1x32xf32>
      %59 = vector.broadcast %58 : vector<1x32xf32> to vector<16x32xf32>
      %60 = arith.addf %57, %59 : vector<16x32xf32>
      %c0_34 = arith.constant 0 : index
      %c0_35 = arith.constant 0 : index
      %61 = vector.load %arg1[%c0_34, %c0_35] : memref<16x32xf32, #tpu.memory_space<vmem>>, vector<16x32xf32>
      %62 = arith.negf %60 : vector<16x32xf32>
      %63 = math.exp %62 : vector<16x32xf32>
      %cst_36 = arith.constant 1.000000e+00 : f32
      %64 = vector.broadcast %cst_36 : f32 to vector<16x32xf32>
      %65 = arith.addf %64, %63 : vector<16x32xf32>
      %66 = arith.divf %64, %65 : vector<16x32xf32>
      %67 = arith.mulf %60, %66 : vector<16x32xf32>
      %68 = arith.addf %61, %67 : vector<16x32xf32>
      %c0_37 = arith.constant 0 : index
      %c0_38 = arith.constant 0 : index
      %69 = vector.load %arg11[%c0_37, %c0_38] : memref<16x32xf32, #tpu.memory_space<vmem>>, vector<16x32xf32>
      tpu.vector_store %arg11[%c0_37, %c0_38], %68 {strides = array<i32>} : memref<16x32xf32, #tpu.memory_space<vmem>>, vector<16x32xf32>,
    } else {
    }
    return
  }
  func.func @transform_0(%arg0: i32) -> (i32, i32) {
    %c0_i32 = arith.constant 0 : i32
    %c0_i32_0 = arith.constant 0 : i32
    %c0_i32_1 = arith.constant 0 : i32
    return %c0_i32, %c0_i32_0 : i32, i32
  }
  func.func @transform_1(%arg0: i32) -> (i32, i32) {
    %c0_i32 = arith.constant 0 : i32
    %c0_i32_0 = arith.constant 0 : i32
    return %arg0, %c0_i32 : i32, i32
  }
  func.func @transform_2(%arg0: i32) -> (i32, i32) {
    %c0_i32 = arith.constant 0 : i32
    %c0_i32_0 = arith.constant 0 : i32
    return %arg0, %c0_i32 : i32, i32
  }
  func.func @transform_3(%arg0: i32) -> (i32, i32) {
    %c0_i32 = arith.constant 0 : i32
    %c0_i32_0 = arith.constant 0 : i32
    return %arg0, %c0_i32 : i32, i32
  }
  func.func @transform_4(%arg0: i32) -> (i32, i32) {
    %c0_i32 = arith.constant 0 : i32
    %c0_i32_0 = arith.constant 0 : i32
    %c0_i32_1 = arith.constant 0 : i32
    return %c0_i32, %c0_i32_0 : i32, i32
  }
  func.func @transform_5(%arg0: i32) -> (i32, i32) {
    %c0_i32 = arith.constant 0 : i32
    %c0_i32_0 = arith.constant 0 : i32
    %c0_i32_1 = arith.constant 0 : i32
    return %c0_i32, %c0_i32_0 : i32, i32
  }
  func.func @transform_6(%arg0: i32) -> (i32, i32) {
    %c0_i32 = arith.constant 0 : i32
    %c0_i32_0 = arith.constant 0 : i32
    %c0_i32_1 = arith.constant 0 : i32
    return %c0_i32, %c0_i32_0 : i32, i32
  }
  func.func @transform_7(%arg0: i32) -> (i32, i32) {
    %c0_i32 = arith.constant 0 : i32
    %c0_i32_0 = arith.constant 0 : i32
    %c0_i32_1 = arith.constant 0 : i32
    return %c0_i32, %c0_i32_0 : i32, i32
  }
  func.func @transform_8(%arg0: i32) -> (i32, i32) {
    %c0_i32 = arith.constant 0 : i32
    %c0_i32_0 = arith.constant 0 : i32
    %c0_i32_1 = arith.constant 0 : i32
    return %c0_i32, %c0_i32_0 : i32, i32
  }
  func.func @transform_9(%arg0: i32) -> (i32, i32) {
    %c0_i32 = arith.constant 0 : i32
    %c0_i32_0 = arith.constant 0 : i32
    %c0_i32_1 = arith.constant 0 : i32
    return %c0_i32, %c0_i32_0 : i32, i32
  }
  func.func @transform_10(%arg0: i32) -> (i32, i32) {
    %c0_i32 = arith.constant 0 : i32
    %c0_i32_0 = arith.constant 0 : i32
    %c0_i32_1 = arith.constant 0 : i32
    return %c0_i32, %c0_i32_0 : i32, i32
  }
  func.func @transform_11(%arg0: i32) -> (i32, i32) {
    %c0_i32 = arith.constant 0 : i32
    %c0_i32_0 = arith.constant 0 : i32
    return %arg0, %c0_i32 : i32, i32
  }
}

</mosaic_0001>

<llo_original>
// kernel: tpu_custom_call.1
$region0: #{tpu_custom_call.1}
  #allocation0 [shape = 'u32[]', space=smem, size = 0x4, offset = 0x4, fixed_abs, tag = 'smem constant byte address 0x4 - core index']
  #allocation1 [shape = 'u32[144,128]{1,0:T(1,128)}', space=vmem, size = 0x12000, scoped, tag = 'internal scratch']
  #allocation2 [shape = 'f32[16,128]{1,0:T(8,128)}', space=vmem, size = 0x2000, scoped, tag = 'scratch operand']
  #allocation3 [shape = 'bf16[32,64]{1,0:T(16,128)(2,1)}', space=vmem, size = 0x2000, scoped, tag = 'scratch operand']
  #allocation4 [shape = 'f32[16,64]{1,0:T(8,128)}', space=vmem, size = 0x2000, scoped, tag = 'scratch operand']
  %s0 = inlined_call_operand.vmem [shape: f32[16,32], index: 0, kind: input, shape index: {}]
  %s1 = inlined_call_operand.vmem [shape: f32[48,32], index: 1, kind: input, shape index: {}]
  %s2 = inlined_call_operand.vmem [shape: bf16[48,32], index: 2, kind: input, shape index: {}]
  %s3 = inlined_call_operand.vmem [shape: bf16[48,16], index: 3, kind: input, shape index: {}]
  %s4 = inlined_call_operand.vmem [shape: f32[32,128], index: 4, kind: input, shape index: {}]
  %s5 = inlined_call_operand.vmem [shape: f32[1,128], index: 5, kind: input, shape index: {}]
  %s6 = inlined_call_operand.vmem [shape: bf16[32,32], index: 6, kind: input, shape index: {}]
  %s7 = inlined_call_operand.vmem [shape: f32[1,32], index: 7, kind: input, shape index: {}]
  %s8 = inlined_call_operand.vmem [shape: f32[2,32], index: 8, kind: input, shape index: {}]
  %s9 = inlined_call_operand.vmem [shape: f32[2,32], index: 9, kind: input, shape index: {}]
  %s10 = inlined_call_operand.hbm [shape: f32[16,32], index: 10, kind: output, shape index: {0}]
  %s11 = inlined_call_operand.vmem [shape: f32[48,32], index: 11, kind: output, shape index: {1}]
  %12 = xla_tuple %s10, %s11
  %s13 = sld [smem:[#allocation0]]
  $region89: #{tpu_custom_call.1} parent=0
    _
  %s15 = ssub.s32 1, %s13
  %s16 = scalar_select 0, %s15, %s13
  $region1: #{tpu_custom_call.1} parent=0
    #allocation5 [shape = 'u8[8192]{0}', space=vmem, size = 0x2000, scoped, tag = 'output window, operand 0, single buffered']
    #allocation6 [shape = 's32[2]{0}', space=sflag, size = 0x8, scoped, tag = 'scoped memory for tpu_custom_call.1']
    %17 = vsyncpa [#allocation6], 0
    loop: start=0, step=1, limit=5
    $region2: #{tpu_custom_call.1} parent=1 // loop_pre_header
      _
    $region3: #{tpu_custom_call.1} parent=1 // loop_header
      %s19 = sphi 0, %s23
      %p20 = scmp.ge.s32.totalorder %s19, 5
      %s27 = sphi 0, %s27
      %s29 = sphi 0, %s27
      %s30 = sphi 0, %s29
      %s44 = sphi 0, %s30
      %s50 = sphi 0, %s52
      %s53 = sphi 0, %s50
      %s54 = sphi 0, %s53
      %s70 = sphi 0, %s54
      %s76 = sphi 0, %s78
      %s79 = sphi 0, %s76
      %s80 = sphi 0, %s79
      %s96 = sphi 0, %s80
      %s102 = sphi 0, %s104
      %s105 = sphi 0, %s102
      %s106 = sphi 0, %s105
      %s122 = sphi 0, %s106
      %s126 = sphi 0, %s126
      %s128 = sphi 0, %s126
      %s129 = sphi 0, %s128
      %s143 = sphi 0, %s129
      %s147 = sphi 0, %s147
      %s149 = sphi 0, %s147
      %s150 = sphi 0, %s149
      %s164 = sphi 0, %s150
      %s168 = sphi 0, %s168
      %s170 = sphi 0, %s168
      %s171 = sphi 0, %s170
      %s185 = sphi 0, %s171
      %s189 = sphi 0, %s189
      %s191 = sphi 0, %s189
      %s192 = sphi 0, %s191
      %s206 = sphi 0, %s192
      %s210 = sphi 0, %s210
      %s212 = sphi 0, %s210
      %s213 = sphi 0, %s212
      %s227 = sphi 0, %s213
      %s231 = sphi 0, %s231
      %s233 = sphi 0, %s231
      %s234 = sphi 0, %s233
      %s248 = sphi 0, %s234
      %s252 = sphi 0, %s252
      %s254 = sphi 0, %s252
      %s255 = sphi 0, %s254
      %s269 = sphi 0, %s255
      %s275 = sphi 0, %s277
      %s278 = sphi 0, %s275
      %s279 = sphi 0, %s278
      %s295 = sphi 0, %s279
    $region4: #{tpu_custom_call.1} parent=1 // loop_header_branch
      %22 = sbr.rel (%p20) target = $region8
    $region5: #{tpu_custom_call.1} parent=1 // loop_body
      %s24 = ssub.s32 %s19, 1
      %s25 = ssub.s32 %s19, 2
      %s26 = sadd.s32 %s19, 1
      %s28 = sadd.s32 %s27, 1
      %p31 = scmp.eq.s32.totalorder %s19, 2
      %p32 = scmp.ne.s32.totalorder %s27, %s29
      %p33 = scmp.eq.s32.totalorder %s19, 0
      %p34 = por %p32, %p33
      %p35 = scmp.ne.s32.totalorder %s27, %s29
      %p36 = scmp.eq.s32.totalorder %s24, 2
      %p37 = por %p35, %p36
      %p38 = scmp.ne.s32.totalorder %s29, %s30
      %p39 = scmp.eq.s32.totalorder %s24, 0
      %p40 = por %p38, %p39
      %p41 = scmp.ne.s32.totalorder %s29, %s30
      %p42 = scmp.eq.s32.totalorder %s25, 2
      %p43 = por %p41, %p42
      %p45 = scmp.ne.s32.totalorder %s30, %s44
      %p46 = scmp.eq.s32.totalorder %s25, 0
      %p47 = por %p45, %p46
      %s48 = ssub.s32 %s19, %s26
      %p49 = scmp.eq.s32.totalorder %s48, 0
      %s51 = sadd.s32 %s50, 1
      %s52 = scalar_select %p49, %s50, %s51
      %p55 = pneg %p49
      %p56 = scmp.eq.s32.totalorder %s19, 2
      %p57 = por %p55, %p56
      %p58 = scmp.ne.s32.totalorder %s50, %s53
      %p59 = scmp.eq.s32.totalorder %s19, 0
      %p60 = por %p58, %p59
      %p61 = scmp.ne.s32.totalorder %s50, %s53
      %p62 = scmp.eq.s32.totalorder %s24, 2
      %p63 = por %p61, %p62
      %p64 = scmp.ne.s32.totalorder %s53, %s54
      %p65 = scmp.eq.s32.totalorder %s24, 0
      %p66 = por %p64, %p65
      %p67 = scmp.ne.s32.totalorder %s53, %s54
      %p68 = scmp.eq.s32.totalorder %s25, 2
      %p69 = por %p67, %p68
      %p71 = scmp.ne.s32.totalorder %s54, %s70
      %p72 = scmp.eq.s32.totalorder %s25, 0
      %p73 = por %p71, %p72
      %s74 = ssub.s32 %s19, %s26
      %p75 = scmp.eq.s32.totalorder %s74, 0
      %s77 = sadd.s32 %s76, 1
      %s78 = scalar_select %p75, %s76, %s77
      %p81 = pneg %p75
      %p82 = scmp.eq.s32.totalorder %s19, 2
      %p83 = por %p81, %p82
      %p84 = scmp.ne.s32.totalorder %s76, %s79
      %p85 = scmp.eq.s32.totalorder %s19, 0
      %p86 = por %p84, %p85
      %p87 = scmp.ne.s32.totalorder %s76, %s79
      %p88 = scmp.eq.s32.totalorder %s24, 2
      %p89 = por %p87, %p88
      %p90 = scmp.ne.s32.totalorder %s79, %s80
      %p91 = scmp.eq.s32.totalorder %s24, 0
      %p92 = por %p90, %p91
      %p93 = scmp.ne.s32.totalorder %s79, %s80
      %p94 = scmp.eq.s32.totalorder %s25, 2
      %p95 = por %p93, %p94
      %p97 = scmp.ne.s32.totalorder %s80, %s96
      %p98 = scmp.eq.s32.totalorder %s25, 0
      %p99 = por %p97, %p98
      %s100 = ssub.s32 %s19, %s26
      %p101 = scmp.eq.s32.totalorder %s100, 0
      %s103 = sadd.s32 %s102, 1
      %s104 = scalar_select %p101, %s102, %s103
      %p107 = pneg %p101
      %p108 = scmp.eq.s32.totalorder %s19, 2
      %p109 = por %p107, %p108
      %p110 = scmp.ne.s32.totalorder %s102, %s105
      %p111 = scmp.eq.s32.totalorder %s19, 0
      %p112 = por %p110, %p111
      %p113 = scmp.ne.s32.totalorder %s102, %s105
      %p114 = scmp.eq.s32.totalorder %s24, 2
      %p115 = por %p113, %p114
      %p116 = scmp.ne.s32.totalorder %s105, %s106
      %p117 = scmp.eq.s32.totalorder %s24, 0
      %p118 = por %p116, %p117
      %p119 = scmp.ne.s32.totalorder %s105, %s106
      %p120 = scmp.eq.s32.totalorder %s25, 2
      %p121 = por %p119, %p120
      %p123 = scmp.ne.s32.totalorder %s106, %s122
      %p124 = scmp.eq.s32.totalorder %s25, 0
      %p125 = por %p123, %p124
      %s127 = sadd.s32 %s126, 1
      %p130 = scmp.eq.s32.totalorder %s19, 2
      %p131 = scmp.ne.s32.totalorder %s126, %s128
      %p132 = scmp.eq.s32.totalorder %s19, 0
      %p133 = por %p131, %p132
      %p134 = scmp.ne.s32.totalorder %s126, %s128
      %p135 = scmp.eq.s32.totalorder %s24, 2
      %p136 = por %p134, %p135
      %p137 = scmp.ne.s32.totalorder %s128, %s129
      %p138 = scmp.eq.s32.totalorder %s24, 0
      %p139 = por %p137, %p138
      %p140 = scmp.ne.s32.totalorder %s128, %s129
      %p141 = scmp.eq.s32.totalorder %s25, 2
      %p142 = por %p140, %p141
      %p144 = scmp.ne.s32.totalorder %s129, %s143
      %p145 = scmp.eq.s32.totalorder %s25, 0
      %p146 = por %p144, %p145
      %s148 = sadd.s32 %s147, 1
      %p151 = scmp.eq.s32.totalorder %s19, 2
      %p152 = scmp.ne.s32.totalorder %s147, %s149
      %p153 = scmp.eq.s32.totalorder %s19, 0
      %p154 = por %p152, %p153
      %p155 = scmp.ne.s32.totalorder %s147, %s149
      %p156 = scmp.eq.s32.totalorder %s24, 2
      %p157 = por %p155, %p156
      %p158 = scmp.ne.s32.totalorder %s149, %s150
      %p159 = scmp.eq.s32.totalorder %s24, 0
      %p160 = por %p158, %p159
      %p161 = scmp.ne.s32.totalorder %s149, %s150
      %p162 = scmp.eq.s32.totalorder %s25, 2
      %p163 = por %p161, %p162
      %p165 = scmp.ne.s32.totalorder %s150, %s164
      %p166 = scmp.eq.s32.totalorder %s25, 0
      %p167 = por %p165, %p166
      %s169 = sadd.s32 %s168, 1
      %p172 = scmp.eq.s32.totalorder %s19, 2
      %p173 = scmp.ne.s32.totalorder %s168, %s170
      %p174 = scmp.eq.s32.totalorder %s19, 0
      %p175 = por %p173, %p174
      %p176 = scmp.ne.s32.totalorder %s168, %s170
      %p177 = scmp.eq.s32.totalorder %s24, 2
      %p178 = por %p176, %p177
      %p179 = scmp.ne.s32.totalorder %s170, %s171
      %p180 = scmp.eq.s32.totalorder %s24, 0
      %p181 = por %p179, %p180
      %p182 = scmp.ne.s32.totalorder %s170, %s171
      %p183 = scmp.eq.s32.totalorder %s25, 2
      %p184 = por %p182, %p183
      %p186 = scmp.ne.s32.totalorder %s171, %s185
      %p187 = scmp.eq.s32.totalorder %s25, 0
      %p188 = por %p186, %p187
      %s190 = sadd.s32 %s189, 1
      %p193 = scmp.eq.s32.totalorder %s19, 2
      %p194 = scmp.ne.s32.totalorder %s189, %s191
      %p195 = scmp.eq.s32.totalorder %s19, 0
      %p196 = por %p194, %p195
      %p197 = scmp.ne.s32.totalorder %s189, %s191
      %p198 = scmp.eq.s32.totalorder %s24, 2
      %p199 = por %p197, %p198
      %p200 = scmp.ne.s32.totalorder %s191, %s192
      %p201 = scmp.eq.s32.totalorder %s24, 0
      %p202 = por %p200, %p201
      %p203 = scmp.ne.s32.totalorder %s191, %s192
      %p204 = scmp.eq.s32.totalorder %s25, 2
      %p205 = por %p203, %p204
      %p207 = scmp.ne.s32.totalorder %s192, %s206
      %p208 = scmp.eq.s32.totalorder %s25, 0
      %p209 = por %p207, %p208
      %s211 = sadd.s32 %s210, 1
      %p214 = scmp.eq.s32.totalorder %s19, 2
      %p215 = scmp.ne.s32.totalorder %s210, %s212
      %p216 = scmp.eq.s32.totalorder %s19, 0
      %p217 = por %p215, %p216
      %p218 = scmp.ne.s32.totalorder %s210, %s212
      %p219 = scmp.eq.s32.totalorder %s24, 2
      %p220 = por %p218, %p219
      %p221 = scmp.ne.s32.totalorder %s212, %s213
      %p222 = scmp.eq.s32.totalorder %s24, 0
      %p223 = por %p221, %p222
      %p224 = scmp.ne.s32.totalorder %s212, %s213
      %p225 = scmp.eq.s32.totalorder %s25, 2
      %p226 = por %p224, %p225
      %p228 = scmp.ne.s32.totalorder %s213, %s227
      %p229 = scmp.eq.s32.totalorder %s25, 0
      %p230 = por %p228, %p229
      %s232 = sadd.s32 %s231, 1
      %p235 = scmp.eq.s32.totalorder %s19, 2
      %p236 = scmp.ne.s32.totalorder %s231, %s233
      %p237 = scmp.eq.s32.totalorder %s19, 0
      %p238 = por %p236, %p237
      %p239 = scmp.ne.s32.totalorder %s231, %s233
      %p240 = scmp.eq.s32.totalorder %s24, 2
      %p241 = por %p239, %p240
      %p242 = scmp.ne.s32.totalorder %s233, %s234
      %p243 = scmp.eq.s32.totalorder %s24, 0
      %p244 = por %p242, %p243
      %p245 = scmp.ne.s32.totalorder %s233, %s234
      %p246 = scmp.eq.s32.totalorder %s25, 2
      %p247 = por %p245, %p246
      %p249 = scmp.ne.s32.totalorder %s234, %s248
      %p250 = scmp.eq.s32.totalorder %s25, 0
      %p251 = por %p249, %p250
      %s253 = sadd.s32 %s252, 1
      %p256 = scmp.eq.s32.totalorder %s19, 2
      %p257 = scmp.ne.s32.totalorder %s252, %s254
      %p258 = scmp.eq.s32.totalorder %s19, 0
      %p259 = por %p257, %p258
      %p260 = scmp.ne.s32.totalorder %s252, %s254
      %p261 = scmp.eq.s32.totalorder %s24, 2
      %p262 = por %p260, %p261
      %p263 = scmp.ne.s32.totalorder %s254, %s255
      %p264 = scmp.eq.s32.totalorder %s24, 0
      %p265 = por %p263, %p264
      %p266 = scmp.ne.s32.totalorder %s254, %s255
      %p267 = scmp.eq.s32.totalorder %s25, 2
      %p268 = por %p266, %p267
      %p270 = scmp.ne.s32.totalorder %s255, %s269
      %p271 = scmp.eq.s32.totalorder %s25, 0
      %p272 = por %p270, %p271
      %s273 = ssub.s32 %s19, %s26
      %p274 = scmp.eq.s32.totalorder %s273, 0
      %s276 = sadd.s32 %s275, 1
      %s277 = scalar_select %p274, %s275, %s276
      %p280 = pneg %p274
      %p281 = scmp.eq.s32.totalorder %s19, 2
      %p282 = por %p280, %p281
      %p283 = scmp.ne.s32.totalorder %s275, %s278
      %p284 = scmp.eq.s32.totalorder %s19, 0
      %p285 = por %p283, %p284
      %p286 = scmp.ne.s32.totalorder %s275, %s278
      %p287 = scmp.eq.s32.totalorder %s24, 2
      %p288 = por %p286, %p287
      %p289 = scmp.ne.s32.totalorder %s278, %s279
      %p290 = scmp.eq.s32.totalorder %s24, 0
      %p291 = por %p289, %p290
      %p292 = scmp.ne.s32.totalorder %s278, %s279
      %p293 = scmp.eq.s32.totalorder %s25, 2
      %p294 = por %p292, %p293
      %p296 = scmp.ne.s32.totalorder %s279, %s295
      %p297 = scmp.eq.s32.totalorder %s25, 0
      %p298 = por %p296, %p297
      %p299 = scmp.le.s32.totalorder 1, %s19
      %p300 = scmp.lt.s32.totalorder %s19, 4
      %p301 = pnand %p299, %p300
      %p302 = pneg %p301
      // Predicated region
      $region9: #{tpu_custom_call.1} parent=5 // pred_check
        _
      $region10: #{tpu_custom_call.1} parent=5 // pred_check_branch
        %304 = sbr.rel (%p301) target = $region12
      $region11: #{tpu_custom_call.1} parent=5 // pred_region
        %s305 = ssub.s32 %s19, 1
        // Predicated region
        $region13: #{tpu_custom_call.1} parent=11 // pred_check
          %p306 = pneg %p40
        $region14: #{tpu_custom_call.1} parent=11 // pred_check_branch
          %308 = sbr.rel (%p306) target = $region16
        $region15: #{tpu_custom_call.1} parent=11 // pred_region
          _
        $region16: #{tpu_custom_call.1} parent=11 // pred_fallthru
          _
        // Predicated region
        $region17: #{tpu_custom_call.1} parent=11 // pred_check
          %p309 = pneg %p139
        $region18: #{tpu_custom_call.1} parent=11 // pred_check_branch
          %311 = sbr.rel (%p309) target = $region20
        $region19: #{tpu_custom_call.1} parent=11 // pred_region
          _
        $region20: #{tpu_custom_call.1} parent=11 // pred_fallthru
          _
        // Predicated region
        $region21: #{tpu_custom_call.1} parent=11 // pred_check
          %p312 = pneg %p160
        $region22: #{tpu_custom_call.1} parent=11 // pred_check_branch
          %314 = sbr.rel (%p312) target = $region24
        $region23: #{tpu_custom_call.1} parent=11 // pred_region
          _
        $region24: #{tpu_custom_call.1} parent=11 // pred_fallthru
          _
        // Predicated region
        $region25: #{tpu_custom_call.1} parent=11 // pred_check
          %p315 = pneg %p181
        $region26: #{tpu_custom_call.1} parent=11 // pred_check_branch
          %317 = sbr.rel (%p315) target = $region28
        $region27: #{tpu_custom_call.1} parent=11 // pred_region
          _
        $region28: #{tpu_custom_call.1} parent=11 // pred_fallthru
          _
        // Predicated region
        $region29: #{tpu_custom_call.1} parent=11 // pred_check
          %p318 = pneg %p202
        $region30: #{tpu_custom_call.1} parent=11 // pred_check_branch
          %320 = sbr.rel (%p318) target = $region32
        $region31: #{tpu_custom_call.1} parent=11 // pred_region
          _
        $region32: #{tpu_custom_call.1} parent=11 // pred_fallthru
          _
        // Predicated region
        $region33: #{tpu_custom_call.1} parent=11 // pred_check
          %p321 = pneg %p223
        $region34: #{tpu_custom_call.1} parent=11 // pred_check_branch
          %323 = sbr.rel (%p321) target = $region36
        $region35: #{tpu_custom_call.1} parent=11 // pred_region
          _
        $region36: #{tpu_custom_call.1} parent=11 // pred_fallthru
          _
        // Predicated region
        $region37: #{tpu_custom_call.1} parent=11 // pred_check
          %p324 = pneg %p244
        $region38: #{tpu_custom_call.1} parent=11 // pred_check_branch
          %326 = sbr.rel (%p324) target = $region40
        $region39: #{tpu_custom_call.1} parent=11 // pred_region
          _
        $region40: #{tpu_custom_call.1} parent=11 // pred_fallthru
          _
      $region12: #{tpu_custom_call.1} parent=5 // pred_fallthru
        _
      %p327 = scmp.lt.s32.totalorder %s19, 3
      // Predicated region
      $region41: #{tpu_custom_call.1} parent=5 // pred_check
        %p328 = pneg %p327
      $region42: #{tpu_custom_call.1} parent=5 // pred_check_branch
        %330 = sbr.rel (%p328) target = $region44
      $region43: #{tpu_custom_call.1} parent=5 // pred_region
        // Predicated region
        $region45: #{tpu_custom_call.1} parent=43 // pred_check
          %p331 = pneg %p60
        $region46: #{tpu_custom_call.1} parent=43 // pred_check_branch
          %333 = sbr.rel (%p331) target = $region48
        $region47: #{tpu_custom_call.1} parent=43 // pred_region
          %s334 = smul.u32 2, %s19
          %p335 = scmp.lt.s32.totalorder %s334, 5
          %s336 = scalar_select %p335, %s334, 5
          %s337 = smul.addr %s336, 8
          %s338 = scalar_lea.vmem %s1, %s337
          %s339 = smul.u32 2, %s19
        $region48: #{tpu_custom_call.1} parent=43 // pred_fallthru
          _
        // Predicated region
        $region49: #{tpu_custom_call.1} parent=43 // pred_check
          %p340 = pneg %p86
        $region50: #{tpu_custom_call.1} parent=43 // pred_check_branch
          %342 = sbr.rel (%p340) target = $region52
        $region51: #{tpu_custom_call.1} parent=43 // pred_region
          %s343 = smul.u32 2, %s19
          %p344 = scmp.lt.s32.totalorder %s343, 5
          %s345 = scalar_select %p344, %s343, 5
          %s346 = smul.addr %s345, 4
          %s347 = scalar_lea.vmem %s2, %s346
          %s348 = smul.u32 2, %s19
        $region52: #{tpu_custom_call.1} parent=43 // pred_fallthru
          _
        // Predicated region
        $region53: #{tpu_custom_call.1} parent=43 // pred_check
          %p349 = pneg %p112
        $region54: #{tpu_custom_call.1} parent=43 // pred_check_branch
          %351 = sbr.rel (%p349) target = $region56
        $region55: #{tpu_custom_call.1} parent=43 // pred_region
          %s352 = smul.u32 2, %s19
          %p353 = scmp.lt.s32.totalorder %s352, 5
          %s354 = scalar_select %p353, %s352, 5
          %s355 = smul.addr %s354, 4
          %s356 = scalar_lea.vmem %s3, %s355
          %s357 = smul.u32 2, %s19
        $region56: #{tpu_custom_call.1} parent=43 // pred_fallthru
          _
      $region44: #{tpu_custom_call.1} parent=5 // pred_fallthru
        _
      %p358 = scmp.le.s32.totalorder 1, %s19
      %p359 = scmp.lt.s32.totalorder %s19, 4
      %p360 = pnand %p358, %p359
      %p361 = pneg %p360
      // Predicated region
      $region57: #{tpu_custom_call.1} parent=5 // pred_check
        _
      $region58: #{tpu_custom_call.1} parent=5 // pred_check_branch
        %363 = sbr.rel (%p360) target = $region60
      $region59: #{tpu_custom_call.1} parent=5 // pred_region
        %s364 = ssub.s32 %s19, 1
        %p365 = pneg %p40
        %p366 = pneg %p37
        %s367 = smul.u32 2, %s24
        %p368 = scmp.lt.s32.totalorder %s367, 5
        %s369 = scalar_select %p368, %s367, 5
        %s370 = smul.addr %s369, 8
        %s371 = scalar_lea.vmem %s1, %s370
        %p372 = pneg %p66
        %p373 = pneg %p63
        %s374 = smul.u32 2, %s24
        %p375 = scmp.lt.s32.totalorder %s374, 5
        %s376 = scalar_select %p375, %s374, 5
        %s377 = smul.addr %s376, 4
        %s378 = scalar_lea.vmem %s2, %s377
        %p379 = pneg %p92
        %p380 = pneg %p89
        %s381 = smul.u32 2, %s24
        %p382 = scmp.lt.s32.totalorder %s381, 5
        %s383 = scalar_select %p382, %s381, 5
        %s384 = smul.addr %s383, 4
        %s385 = scalar_lea.vmem %s3, %s384
        %p386 = pneg %p118
        %p387 = pneg %p115
        %p388 = pneg %p139
        %p389 = pneg %p136
        %p390 = pneg %p160
        %p391 = pneg %p157
        %p392 = pneg %p181
        %p393 = pneg %p178
        %p394 = pneg %p202
        %p395 = pneg %p199
        %p396 = pneg %p223
        %p397 = pneg %p220
        %p398 = pneg %p244
        %p399 = pneg %p241
        %p400 = pneg %p265
        %p401 = pneg %p262
        %p402 = pneg %p291
        %p403 = pneg %p288
        %s404 = smul.u32 2, %s24
        %p405 = scmp.lt.s32.totalorder %s404, 5
        %s406 = scalar_select %p405, %s404, 5
        %s407 = smul.addr %s406, 8
        %s408 = scalar_lea.vmem %s11, %s407
        %s409 = smul.u32 2, %s24
        %p410 = scmp.lt.s32.totalorder %s409, 5
        %s411 = scalar_select %p410, %s409, 5
        %s412 = smul.addr %s411, 8
        %s413 = scalar_lea.vmem %s1, %s412
        %s414 = smul.u32 2, %s24
        %s415 = smul.u32 2, %s24
        %p416 = scmp.lt.s32.totalorder %s415, 5
        %s417 = scalar_select %p416, %s415, 5
        %s418 = smul.addr %s417, 4
        %s419 = scalar_lea.vmem %s2, %s418
        %s420 = smul.u32 2, %s24
        %s421 = smul.u32 2, %s24
        %p422 = scmp.lt.s32.totalorder %s421, 5
        %s423 = scalar_select %p422, %s421, 5
        %s424 = smul.addr %s423, 4
        %s425 = scalar_lea.vmem %s3, %s424
        %s426 = smul.u32 2, %s24
        %s427 = smul.u32 2, %s24
        %p428 = scmp.lt.s32.totalorder %s427, 5
        %s429 = scalar_select %p428, %s427, 5
        %s430 = smul.addr %s429, 8
        %s431 = scalar_lea.vmem %s11, %s430
        %s432 = smul.u32 2, %s24
        %p434 = scmp.eq.s32.totalorder %s24, 0
        // Predicated region
        $region61: #{tpu_custom_call.1} parent=59 // pred_check
          %p435 = pneg %p434
        $region62: #{tpu_custom_call.1} parent=59 // pred_check_branch
          %437 = sbr.rel (%p435) target = $region64
        $region63: #{tpu_custom_call.1} parent=59 // pred_region
          %v438 = vld [vmem:[%s0] sm:$0xff]
          %v439 = vld [vmem:[%s0 + $0x8] sm:$0xff]
          %v440 = vld [vmem:[%s4] sm:$0xff]
          %v441 = vld [vmem:[%s4 + $0x8] sm:$0xff]
          %v442 = vld [vmem:[%s4 + $0x10] sm:$0xff]
          %v443 = vld [vmem:[%s4 + $0x18] sm:$0xff]
          %v444 = vld [vmem:[%s5] sm:$0x1]
          %v446 = vlaneseq
          %v447 = vshrl.u32 %v446, 7
          %v448 = vsub.s32 0, %v447
          %v449 = vrot.slane %v444, %v448
          %vm451 = vcmask 261120
          %v453 = vsel %vm451, %v438, 0
          %v456 = vsel %vm451, %v439, 0
          %458 = vmatprep.subr.mxu0 0.0
          %459 = vmatpush1.msra.mxu0 %v440
          %460 = vmatprep.subr.mxu0 0.0
          %461 = vmatpush1.msra.mxu0 %v441
          %462 = vmatprep.subr.mxu0 0.0
          %463 = vmatpush1.msra.mxu0 %v442
          %464 = vmatprep.subr.mxu0 0.0
          %465 = vmatpush1.msra.mxu0 %v443
          %466 = vmatprep.subr.mxu0 0.0
          %467 = vmatpush1.msra.mxu0 0.0
          %468 = vmatprep.subr.mxu0 0.0
          %469 = vmatpush1.msra.mxu0 0.0
          %470 = vmatprep.subr.mxu0 0.0
          %471 = vmatpush1.msra.mxu0 0.0
          %472 = vmatprep.subr.mxu0 0.0
          %473 = vmatpush1.msra.mxu0 0.0
          %474 = vmatprep.subr.mxu0 0.0
          %475 = vmatpush1.msra.mxu0 0.0
          %476 = vmatprep.subr.mxu0 0.0
          %477 = vmatpush1.msra.mxu0 0.0
          %478 = vmatprep.subr.mxu0 0.0
          %479 = vmatpush1.msra.mxu0 0.0
          %480 = vmatprep.subr.mxu0 0.0
          %481 = vmatpush1.msra.mxu0 0.0
          %482 = vmatprep.subr.mxu0 0.0
          %483 = vmatpush1.msra.mxu0 0.0
          %484 = vmatprep.subr.mxu0 0.0
          %485 = vmatpush1.msra.mxu0 0.0
          %486 = vmatprep.subr.mxu0 0.0
          %487 = vmatpush1.msra.mxu0 0.0
          %488 = vmatprep.subr.mxu0 0.0
          %489 = vmatpush1.msra.mxu0 0.0
          %490 = vmatprep.subr.mxu0 0.0
          %491 = vmatpush1.msra.mxu0 0.0
          %492 = vmatprep.subr.mxu0 0.0
          %493 = vmatpush1.msra.mxu0 0.0
          %494 = vmatprep.subr.mxu0 0.0
          %495 = vmatpush1.msra.mxu0 0.0
          %496 = vmatprep.subr.mxu0 0.0
          %497 = vmatpush1.msra.mxu0 0.0
          %498 = vmatprep.subr.mxu0 0.0
          %499 = vmatpush1.msra.mxu0 0.0
          %500 = vmatprep.subr.mxu0 0.0
          %501 = vmatpush1.msra.mxu0 0.0
          %502 = vmatprep.subr.mxu0 0.0
          %503 = vmatpush1.msra.mxu0 0.0
          %504 = vmatprep.subr.mxu0 0.0
          %505 = vmatpush1.msra.mxu0 0.0
          %506 = vmatprep.subr.mxu0 0.0
          %507 = vmatpush1.msra.mxu0 0.0
          %508 = vmatprep.subr.mxu0 0.0
          %509 = vmatpush1.msra.mxu0 0.0
          %510 = vmatprep.subr.mxu0 0.0
          %511 = vmatpush1.msra.mxu0 0.0
          %512 = vmatprep.subr.mxu0 0.0
          %513 = vmatpush1.msra.mxu0 0.0
          %514 = vmatprep.subr.mxu0 0.0
          %515 = vmatpush1.msra.mxu0 0.0
          %516 = vmatprep.subr.mxu0 0.0
          %517 = vmatpush1.msra.mxu0 0.0
          %518 = vmatprep.subr.mxu0 0.0
          %519 = vmatpush1.msra.mxu0 0.0
          %520 = vmatprep.subr.mxu0 0.0
          %521 = vmatpush1.msra.mxu0 0.0
          %522 = vmatprep.mubr.f32.mxu0 0.0
          %523 = vmatmul.mubr.f32.gmra.mrb[0].mxu0 %v453
          %v524 = vpop.f32.mrb[0].mxu0
          %v525 = vadd.f32 %v449, %v524
          %v526 = vpop.f32.mrb[0].mxu0
          %527 = vmatprep.mubr.f32.mxu0 0.0
          %528 = vmatmul.mubr.f32.gmra.mrb[0].mxu0 %v456
          %v529 = vpop.f32.mrb[0].mxu0
          %v530 = vadd.f32 %v449, %v529
          %v531 = vpop.f32.mrb[0].mxu0
          %532 = vdwg.mxu0
          %533 = vst [vmem:[#allocation2] sm:$0xff] %v525
          %534 = vst [vmem:[#allocation2 + $0x8] sm:$0xff] %v530
          %537 = vrot.lane.b32.xlu0 %v525, 64
          %v538 = vpop.permute.xlu0 %537
          %539 = vrot.lane.b32.xlu0 %v530, 64
          %v540 = vpop.permute.xlu0 %539
          %v543 = vsel %vm451, %v538, 0.0
          %v544 = vsel %vm451, %v540, 0.0
          %v545 = vpack.c.bf16 %v530, %v525
          %v546 = vpack.c.bf16 %v544, %v543
          %vm547 = vcmask 523264
          %548 = vst.msk [vmem:[#allocation3] sm:$0xff] %vm547, %v545
          %549 = vst.msk [vmem:[#allocation3 + $0x8] sm:$0xff] %vm547, %v546
          %550 = vst.msk [vmem:[#allocation4] sm:$0xff] %vm547, 0.0
          %551 = vst.msk [vmem:[#allocation4 + $0x8] sm:$0xff] %vm547, 0.0
        $region64: #{tpu_custom_call.1} parent=59 // pred_fallthru
          _
        %v552 = vld [vmem:[%s413] sm:$0xff]
        %v553 = vld [vmem:[%s413 + $0x8] sm:$0xff]
        %v554 = vpack.c.bf16 %v553, %v552
        %v555 = vld [vmem:[%s6] sm:$0xf]
        %v556 = vld [vmem:[%s6 + $0x4] sm:$0xf]
        %v557 = vld [vmem:[%s6 + $0x8] sm:$0xf]
        %v558 = vld [vmem:[%s6 + $0xc] sm:$0xf]
        %v559 = vld [vmem:[%s7] sm:$0x1]
        %v561 = vlaneseq
        %v562 = vshrl.u32 %v561, 7
        %v563 = vsub.s32 0, %v562
        %v564 = vrot.slane %v559, %v563
        %v570 = vunpack.c.l.b16 %v555
        %v571 = vunpack.c.l.b16 %v556
        %v572 = vunpack.c.l.b16 %v557
        %v573 = vunpack.c.l.b16 %v558
        %v574 = vpack.c.b16 %v571, %v570
        %v575 = vpack.c.b16 %v573, %v572
        %vm578 = vcmask 261120
        %v580 = vsel %vm578, %v554, 0
        %582 = vmatprep.subr.bf16.mxu0 0
        %583 = vmatpush1.bf16.msra.mxu0 %v574
        %584 = vmatprep.subr.bf16.mxu0 0
        %585 = vmatpush1.bf16.msra.mxu0 %v575
        %586 = vmatprep.subr.bf16.mxu0 0
        %587 = vmatpush1.bf16.msra.mxu0 0
        %588 = vmatprep.subr.bf16.mxu0 0
        %589 = vmatpush1.bf16.msra.mxu0 0
        %590 = vmatprep.subr.bf16.mxu0 0
        %591 = vmatpush1.bf16.msra.mxu0 0
        %592 = vmatprep.subr.bf16.mxu0 0
        %593 = vmatpush1.bf16.msra.mxu0 0
        %594 = vmatprep.subr.bf16.mxu0 0
        %595 = vmatpush1.bf16.msra.mxu0 0
        %596 = vmatprep.subr.bf16.mxu0 0
        %597 = vmatpush1.bf16.msra.mxu0 0
        %598 = vmatprep.subr.bf16.mxu0 0
        %599 = vmatpush1.bf16.msra.mxu0 0
        %600 = vmatprep.subr.bf16.mxu0 0
        %601 = vmatpush1.bf16.msra.mxu0 0
        %602 = vmatprep.subr.bf16.mxu0 0
        %603 = vmatpush1.bf16.msra.mxu0 0
        %604 = vmatprep.subr.bf16.mxu0 0
        %605 = vmatpush1.bf16.msra.mxu0 0
        %606 = vmatprep.subr.bf16.mxu0 0
        %607 = vmatpush1.bf16.msra.mxu0 0
        %608 = vmatprep.subr.bf16.mxu0 0
        %609 = vmatpush1.bf16.msra.mxu0 0
        %610 = vmatprep.subr.bf16.mxu0 0
        %611 = vmatpush1.bf16.msra.mxu0 0
        %612 = vmatprep.subr.bf16.mxu0 0
        %613 = vmatpush1.bf16.msra.mxu0 0
        %614 = vmatprep.mubr.bf16.mxu0 0
        %615 = vmatmul.mubr.bf16.gmra.mrb[0].mxu0 %v580
        %v616 = vpop.f32.mrb[0].mxu0
        %v617 = vadd.f32 %v564, %v616
        %v618 = vpop.f32.mrb[0].mxu0
        %v619 = vpop.f32.mrb[0].mxu0
        %v620 = vadd.f32 %v564, %v619
        %v621 = vpop.f32.mrb[0].mxu0
        %622 = vdwg.mxu0
        %v623 = vld [vmem:[%s419] sm:$0xf]
        %v624 = vld [vmem:[%s419 + $0x4] sm:$0xf]
        %v625 = vld [vmem:[#allocation3] sm:$0xff]
        %v626 = vld [vmem:[#allocation3 + $0x8] sm:$0xff]
        %v629 = vunpack.c.l.b16 %v623
        %v630 = vunpack.c.l.b16 %v624
        %v631 = vpack.c.b16 %v630, %v629
        %v633 = vsel %vm578, %v631, 0
        %635 = vmatprep.subr.bf16.mxu0 0
        %636 = vmatpush1.bf16.msra.mxu0 %v625
        %637 = vmatprep.subr.bf16.mxu0 0
        %638 = vmatpush1.bf16.msra.mxu0 %v626
        %639 = vmatprep.subr.bf16.mxu0 0
        %640 = vmatpush1.bf16.msra.mxu0 0
        %641 = vmatprep.subr.bf16.mxu0 0
        %642 = vmatpush1.bf16.msra.mxu0 0
        %643 = vmatprep.subr.bf16.mxu0 0
        %644 = vmatpush1.bf16.msra.mxu0 0
        %645 = vmatprep.subr.bf16.mxu0 0
        %646 = vmatpush1.bf16.msra.mxu0 0
        %647 = vmatprep.subr.bf16.mxu0 0
        %648 = vmatpush1.bf16.msra.mxu0 0
        %649 = vmatprep.subr.bf16.mxu0 0
        %650 = vmatpush1.bf16.msra.mxu0 0
        %651 = vmatprep.subr.bf16.mxu0 0
        %652 = vmatpush1.bf16.msra.mxu0 0
        %653 = vmatprep.subr.bf16.mxu0 0
        %654 = vmatpush1.bf16.msra.mxu0 0
        %655 = vmatprep.subr.bf16.mxu0 0
        %656 = vmatpush1.bf16.msra.mxu0 0
        %657 = vmatprep.subr.bf16.mxu0 0
        %658 = vmatpush1.bf16.msra.mxu0 0
        %659 = vmatprep.subr.bf16.mxu0 0
        %660 = vmatpush1.bf16.msra.mxu0 0
        %661 = vmatprep.subr.bf16.mxu0 0
        %662 = vmatpush1.bf16.msra.mxu0 0
        %663 = vmatprep.subr.bf16.mxu0 0
        %664 = vmatpush1.bf16.msra.mxu0 0
        %665 = vmatprep.subr.bf16.mxu0 0
        %666 = vmatpush1.bf16.msra.mxu0 0
        %667 = vmatprep.mubr.bf16.mxu0 0
        %668 = vmatmul.mubr.bf16.gmra.mrb[0].mxu0 %v633
        %v669 = vpop.f32.mrb[0].mxu0
        %v670 = vadd.f32 0.0, %v669
        %v671 = vpop.f32.mrb[0].mxu0
        %v672 = vpop.f32.mrb[0].mxu0
        %v673 = vadd.f32 0.0, %v672
        %v674 = vpop.f32.mrb[0].mxu0
        %675 = vdwg.mxu0
        %v676 = vadd.f32 %v670, %v617
        %v677 = vadd.f32 %v673, %v620
        %v678 = vxor.u32 %v676, 2147483648
        %v679 = vxor.u32 %v677, 2147483648
        %v680 = vmul.f32 %v678, 1.442695
        %v681 = vpow.pop %v680
        %v682 = vmul.f32 %v679, 1.442695
        %v683 = vpow.pop %v682
        %v684 = vadd.f32 %v681, 1.0
        %v685 = vadd.f32 %v683, 1.0
        %v686 = vrcp.pop %v684
        %v687 = vmul.f32 1.0, %v686
        %v688 = vrcp.pop %v685
        %v689 = vmul.f32 1.0, %v688
        %692 = vrot.lane.b32.xlu0 %v687, 32
        %v693 = vpop.permute.xlu0 %692
        %694 = vrot.lane.b32.xlu0 %v689, 32
        %v695 = vpop.permute.xlu0 %694
        %v698 = vmul.f32 %v670, %v693
        %v699 = vmul.f32 %v673, %v695
        %702 = vrot.lane.b32.xlu0 %v698, 96
        %v703 = vpop.permute.xlu0 %702
        %704 = vrot.lane.b32.xlu0 %v699, 96
        %v705 = vpop.permute.xlu0 %704
        %v708 = vsel %vm578, %v703, %v693
        %v709 = vsel %vm578, %v705, %v695
        %v710 = vpack.c.bf16 %v709, %v708
        %v711 = vld [vmem:[#allocation4] sm:$0xff]
        %v712 = vld [vmem:[#allocation4 + $0x8] sm:$0xff]
        %v713 = vld [vmem:[%s425] sm:$0xf]
        %v714 = vld [vmem:[%s425 + $0x4] sm:$0xf]
        %v717 = vunpack.c.l.b16 %v713
        %v718 = vunpack.c.l.b16 %v714
        %v719 = vpack.c.b16 %v718, %v717
        %721 = vxpose.xlu0.c.b16.start [1/8] %v719, 128
        %722 = vxpose.xlu0.c.b16.cont [2/8] 0, 128
        %723 = vxpose.xlu0.c.b16.cont [3/8] 0, 128
        %724 = vxpose.xlu0.c.b16.cont [4/8] 0, 128
        %725 = vxpose.xlu0.c.b16.cont [5/8] 0, 128
        %726 = vxpose.xlu0.c.b16.cont [6/8] 0, 128
        %727 = vxpose.xlu0.c.b16.cont [7/8] 0, 128
        %728 = vxpose.xlu0.c.b16.end [8/8] 0, 128
        %v729 = vpop.trf.xlu0
        %v730 = vpop.trf.xlu0
        %v731 = vpop.trf.xlu0
        %v732 = vpop.trf.xlu0
        %v733 = vpop.trf.xlu0
        %v734 = vpop.trf.xlu0
        %v735 = vpop.trf.xlu0
        %v736 = vpop.trf.xlu0
        %vm737 = vcmask 130048
        %v739 = vsel %vm737, %v729, 0
        %741 = vmatprep.subr.bf16.mxu0 0
        %742 = vmatpush1.bf16.msra.mxu0 %v710
        %743 = vmatprep.subr.bf16.mxu0 0
        %744 = vmatpush1.bf16.msra.mxu0 0
        %745 = vmatprep.subr.bf16.mxu0 0
        %746 = vmatpush1.bf16.msra.mxu0 0
        %747 = vmatprep.subr.bf16.mxu0 0
        %748 = vmatpush1.bf16.msra.mxu0 0
        %749 = vmatprep.subr.bf16.mxu0 0
        %750 = vmatpush1.bf16.msra.mxu0 0
        %751 = vmatprep.subr.bf16.mxu0 0
        %752 = vmatpush1.bf16.msra.mxu0 0
        %753 = vmatprep.subr.bf16.mxu0 0
        %754 = vmatpush1.bf16.msra.mxu0 0
        %755 = vmatprep.subr.bf16.mxu0 0
        %756 = vmatpush1.bf16.msra.mxu0 0
        %757 = vmatprep.subr.bf16.mxu0 0
        %758 = vmatpush1.bf16.msra.mxu0 0
        %759 = vmatprep.subr.bf16.mxu0 0
        %760 = vmatpush1.bf16.msra.mxu0 0
        %761 = vmatprep.subr.bf16.mxu0 0
        %762 = vmatpush1.bf16.msra.mxu0 0
        %763 = vmatprep.subr.bf16.mxu0 0
        %764 = vmatpush1.bf16.msra.mxu0 0
        %765 = vmatprep.subr.bf16.mxu0 0
        %766 = vmatpush1.bf16.msra.mxu0 0
        %767 = vmatprep.subr.bf16.mxu0 0
        %768 = vmatpush1.bf16.msra.mxu0 0
        %769 = vmatprep.subr.bf16.mxu0 0
        %770 = vmatpush1.bf16.msra.mxu0 0
        %771 = vmatprep.subr.bf16.mxu0 0
        %772 = vmatpush1.bf16.msra.mxu0 0
        %773 = vmatprep.mubr.bf16.mxu0 0
        %774 = vmatmul.mubr.bf16.gmra.mrb[0].mxu0 %v739
        %v775 = vpop.f32.mrb[0].mxu0
        %v776 = vadd.f32 0.0, %v775
        %v777 = vpop.f32.mrb[0].mxu0
        %v778 = vpop.f32.mrb[0].mxu0
        %v779 = vadd.f32 0.0, %v778
        %v780 = vpop.f32.mrb[0].mxu0
        %781 = vdwg.mxu0
        %v782 = vadd.f32 %v711, %v776
        %v783 = vadd.f32 %v712, %v779
        %vm784 = vcmask 523264
        %785 = vst.msk [vmem:[#allocation4] sm:$0xff] %vm784, %v782
        %786 = vst.msk [vmem:[#allocation4 + $0x8] sm:$0xff] %vm784, %v783
        %v787 = vld [vmem:[%s9] sm:$0x1]
        %v788 = vlaneseq
        %v789 = vshrl.u32 %v788, 7
        %v790 = vsub.s32 0, %v789
        %v791 = vrot.slane %v787, %v790
        %v792 = vmul.f32 %v676, %v791
        %v793 = vmul.f32 %v677, %v791
        %v794 = vld [vmem:[%s9 + $0x1] sm:$0x1]
        %v795 = vlaneseq
        %v796 = vshrl.u32 %v795, 7
        %v797 = vsub.s32 0, %v796
        %v798 = vrot.slane %v794, %v797
        %v799 = vadd.f32 %v792, %v798
        %v800 = vadd.f32 %v793, %v798
        %v801 = vxor.u32 %v799, 2147483648
        %v802 = vxor.u32 %v800, 2147483648
        %v803 = vmul.f32 %v801, 1.442695
        %v804 = vpow.pop %v803
        %v805 = vmul.f32 %v802, 1.442695
        %v806 = vpow.pop %v805
        %v807 = vadd.f32 %v804, 1.0
        %v808 = vadd.f32 %v806, 1.0
        %v809 = vrcp.pop %v807
        %v810 = vmul.f32 1.0, %v809
        %v811 = vrcp.pop %v808
        %v812 = vmul.f32 1.0, %v811
        %v813 = vmul.f32 %v799, %v810
        %v814 = vmul.f32 %v800, %v812
        %v815 = vadd.f32 %v552, %v813
        %v816 = vadd.f32 %v553, %v814
        %817 = vst.msk [vmem:[%s431] sm:$0xff] %vm578, %v815
        %818 = vst.msk [vmem:[%s431 + $0x8] sm:$0xff] %vm578, %v816
        %p819 = scmp.eq.s32.totalorder %s24, 2
        // Predicated region
        $region65: #{tpu_custom_call.1} parent=59 // pred_check
          %p820 = pneg %p819
        $region66: #{tpu_custom_call.1} parent=59 // pred_check_branch
          %822 = sbr.rel (%p820) target = $region68
        $region67: #{tpu_custom_call.1} parent=59 // pred_region
          %v823 = vld [vmem:[#allocation4] sm:$0xff]
          %v824 = vld [vmem:[#allocation4 + $0x8] sm:$0xff]
          %v825 = vadd.f32 %v823, 1e-06
          %v826 = vadd.f32 %v824, 1e-06
          %v827 = vrcp.pop %v825
          %v828 = vrcp.pop %v826
          %831 = vrot.lane.b32.xlu0 %v827, 96
          %v832 = vpop.permute.xlu0 %831
          %833 = vrot.lane.b32.xlu0 %v828, 96
          %v834 = vpop.permute.xlu0 %833
          %v837 = vmul.f32 %v823, %v832
          %v838 = vmul.f32 %v824, %v834
          %v839 = vld [vmem:[#allocation2] sm:$0xff]
          %v840 = vld [vmem:[#allocation2 + $0x8] sm:$0xff]
          %843 = vrot.lane.b32.xlu0 %v837, 96
          %v844 = vpop.permute.xlu0 %843
          %845 = vrot.lane.b32.xlu0 %v838, 96
          %v846 = vpop.permute.xlu0 %845
          %v849 = vadd.f32 %v839, %v844
          %v850 = vadd.f32 %v840, %v846
          %v851 = vld [vmem:[%s8] sm:$0x1]
          %v852 = vlaneseq
          %v853 = vshrl.u32 %v852, 7
          %v854 = vsub.s32 0, %v853
          %v855 = vrot.slane %v851, %v854
          %857 = vrot.lane.b32.xlu0 %v855, 96
          %v858 = vpop.permute.xlu0 %857
          %v860 = vmul.f32 %v849, %v858
          %v861 = vmul.f32 %v850, %v858
          %v862 = vld [vmem:[%s8 + $0x1] sm:$0x1]
          %v863 = vlaneseq
          %v864 = vshrl.u32 %v863, 7
          %v865 = vsub.s32 0, %v864
          %v866 = vrot.slane %v862, %v865
          %868 = vrot.lane.b32.xlu0 %v866, 96
          %v869 = vpop.permute.xlu0 %868
          %v871 = vadd.f32 %v860, %v869
          %v872 = vadd.f32 %v861, %v869
          %v873 = vld [vmem:[%s0] sm:$0xff]
          %v874 = vld [vmem:[%s0 + $0x8] sm:$0xff]
          %v875 = vxor.u32 %v871, 2147483648
          %v876 = vxor.u32 %v872, 2147483648
          %v877 = vmul.f32 %v875, 1.442695
          %v878 = vpow.pop %v877
          %v879 = vmul.f32 %v876, 1.442695
          %v880 = vpow.pop %v879
          %v881 = vadd.f32 %v878, 1.0
          %v882 = vadd.f32 %v880, 1.0
          %v883 = vrcp.pop %v881
          %v884 = vmul.f32 1.0, %v883
          %v885 = vrcp.pop %v882
          %v886 = vmul.f32 1.0, %v885
          %v887 = vmul.f32 %v871, %v884
          %v888 = vmul.f32 %v872, %v886
          %891 = vrot.lane.b32.xlu0 %v887, 32
          %v892 = vpop.permute.xlu0 %891
          %893 = vrot.lane.b32.xlu0 %v888, 32
          %v894 = vpop.permute.xlu0 %893
          %v897 = vadd.f32 %v873, %v892
          %v898 = vadd.f32 %v874, %v894
          %899 = vst.msk [vmem:[#allocation5] sm:$0xff] %vm578, %v897
          %900 = vst.msk [vmem:[#allocation5 + $0x8] sm:$0xff] %vm578, %v898
        $region68: #{tpu_custom_call.1} parent=59 // pred_fallthru
          _
        %s901 = smul.u32 2, %s24
        %p902 = scmp.lt.s32.totalorder %s901, 5
        %s903 = scalar_select %p902, %s901, 5
        %s904 = smul.addr %s903, 8
        %s905 = scalar_lea.vmem %s11, %s904
        // Predicated region
        $region69: #{tpu_custom_call.1} parent=59 // pred_check
          %p906 = pneg %p262
        $region70: #{tpu_custom_call.1} parent=59 // pred_check_branch
          %908 = sbr.rel (%p906) target = $region72
        $region71: #{tpu_custom_call.1} parent=59 // pred_region
          %s910 = ssub.s32 256, 256
          %911 = vsyncadd [#allocation6], %s910
          %s912 = sshll.u32 [#allocation5], 4
          %s913 = int_to_ptr.vmem [resolvable:$true] %s912
          %918 = dma.vmem_to_hbm [thread:$0]  %s913, 256, %s10, [#allocation6], 128, 128, 8
        $region72: #{tpu_custom_call.1} parent=59 // pred_fallthru
          _
        // Predicated region
        $region73: #{tpu_custom_call.1} parent=59 // pred_check
          %p919 = pneg %p288
        $region74: #{tpu_custom_call.1} parent=59 // pred_check_branch
          %921 = sbr.rel (%p919) target = $region76
        $region75: #{tpu_custom_call.1} parent=59 // pred_region
          %s922 = smul.u32 2, %s24
        $region76: #{tpu_custom_call.1} parent=59 // pred_fallthru
          _
        // Predicated region
        $region77: #{tpu_custom_call.1} parent=59 // pred_check
          %p923 = pneg %p262
        $region78: #{tpu_custom_call.1} parent=59 // pred_check_branch
          %925 = sbr.rel (%p923) target = $region80
        $region79: #{tpu_custom_call.1} parent=59 // pred_region
          %926 = dma.done [#allocation6], 256
        $region80: #{tpu_custom_call.1} parent=59 // pred_fallthru
          _
      $region60: #{tpu_custom_call.1} parent=5 // pred_fallthru
        _
      %p927 = scmp.le.s32.totalorder 2, %s19
      // Predicated region
      $region81: #{tpu_custom_call.1} parent=5 // pred_check
        %p928 = pneg %p927
      $region82: #{tpu_custom_call.1} parent=5 // pred_check_branch
        %930 = sbr.rel (%p928) target = $region84
      $region83: #{tpu_custom_call.1} parent=5 // pred_region
        %s931 = ssub.s32 %s19, 2
        // Predicated region
        $region85: #{tpu_custom_call.1} parent=83 // pred_check
          %p932 = pneg %p294
        $region86: #{tpu_custom_call.1} parent=83 // pred_check_branch
          %934 = sbr.rel (%p932) target = $region88
        $region87: #{tpu_custom_call.1} parent=83 // pred_region
          %s935 = smul.u32 2, %s25
          %p936 = scmp.lt.s32.totalorder %s935, 5
          %s937 = scalar_select %p936, %s935, 5
          %s938 = smul.addr %s937, 8
          %s939 = scalar_lea.vmem %s11, %s938
        $region88: #{tpu_custom_call.1} parent=83 // pred_fallthru
          _
      $region84: #{tpu_custom_call.1} parent=5 // pred_fallthru
        _
    $region6: #{tpu_custom_call.1} parent=1 // loop_footer
      %s23 = sadd.s32 1, %s19
    $region7: #{tpu_custom_call.1} parent=1 // loop_footer_branch
      %18 = sbr.rel target = $region3
    $region8: #{tpu_custom_call.1} parent=1 // loop_exit
      _
    %940 = vsyncpa [#allocation6], 1
    %s941 = scalar_lea.sflag [#allocation6], 1
    %942 = vsyncpa %s941, 1

</llo_original>
